<compile_context>
chip_gen: v5e
topology: v5e:2x2
jax: 0.10.0
libtpu: 0.0.40
codegen_flags: <defaults>
</compile_context>

<pallas_src>
import functools

import jax
import jax.numpy as jnp
from jax.experimental import pallas as pl
from jax.experimental.pallas import tpu as pltpu


def _relu(x):
    return jnp.maximum(x, 0.0)


def _round_up(x, m):
    return (x + m - 1) // m * m


def grouper5_kernel(xin_ref, w_ref, qf_ref, wbig_ref, wsml_ref, b_ref, out_ref,
                    *, MT, NS, C, CQ, H, XC, o_wadf, o_wm2):
    f32 = jnp.float32
    bf16 = jnp.bfloat16
    R = MT * NS
    NBIG = C + XC + C + H

    xin = xin_ref[...]                  # (R, 3+C) bf16   [rel_xyz | grouped_feats]
    w_col = w_ref[...]                  # (R, 1)   f32    precomputed inverse-dist weights
    qf = qf_ref[...]                    # (MT, CQ) bf16   per-query features

    # Static views into the packed weight / bias slabs (16-row aligned -> bf16 tiles).
    wq = wsml_ref[0:CQ, :]                         # query_feats_mlp   (CQ -> C)
    wadf = wsml_ref[o_wadf:o_wadf + C, :]          # ad_feats_mlp      (C  -> C)
    wm2 = wsml_ref[o_wm2:o_wm2 + H, :]             # SharedMLP layer 2 (H  -> C)
    b_big = b_ref[0:1, 0:NBIG]                     # [badx | bx | 0 | bm1]
    bq = b_ref[1:2, 0:C]
    badf = b_ref[2:3, 0:C]
    bm2 = b_ref[3:4, 0:C]

    # --- ONE fused block-diagonal dot: (R, 3+C) x (3+C, C+XC+C+H) -----------
    #   rel_xyz -> [ad_xyz | xyz_mlp]   feats -> [ad_feats (raw) | SharedMLP l1]
    y = jnp.dot(xin, wbig_ref[...], preferred_element_type=f32) + b_big     # (R, 112)
    sd = _relu(y[:, 0:C])                          # space_dist (ad_xyz)     (R, C)
    xz = _relu(y[:, C:C + XC])                     # xyz branch              (R, XC)
    fw = y[:, C + XC:C + XC + C]                   # feats @ Wadf (raw)      (R, C)
    h = _relu(y[:, C + XC + C:C + XC + C + H])     # SharedMLP layer 1       (R, H)

    # --- query-side chain (independent of the big dot -> overlaps on MXU) ---
    q_out = _relu(jnp.dot(qf, wq, preferred_element_type=f32) + bq)          # (MT, C)
    qd = jnp.dot(q_out.astype(bf16), wadf, preferred_element_type=f32) + badf  # (MT, C)

    # feats_dist MLP distributed over the subtraction:
    #   relu((q_out - feats) @ Wadf + badf) == relu((q_out@Wadf + badf) - feats@Wadf)
    fd = _relu(qd[:, None, :] - fw.reshape(MT, NS, C)).reshape(R, C)         # (R, C)

    # --- SharedMLP layer 2 on grouped features -------------------------------
    nf = _relu(jnp.dot(h.astype(bf16), wm2, preferred_element_type=f32) + bm2)  # (R, C)

    # --- (weights * new_features) * bi_edge, summed over the neighborhood ----
    prod = (w_col * nf) * (fd * sd)                                          # (R, C)
    out_ref[:, XC:XC + C] = jnp.sum(prod.reshape(MT, NS, C), axis=1)         # (MT, C)

    # --- xyz branch: SharedMLP([3,16]) + max-pool over the neighborhood ------
    out_ref[:, 0:XC] = jnp.max(xz.reshape(MT, NS, XC), axis=1)               # (MT, XC)


def ball_query_and_group(xyz, new_xyz, features, radius, nsample):
    """JAX glue: ball query + grouping (the QueryAndGroup CUDA op)."""
    B, N, _ = xyz.shape
    d2 = jnp.sum((new_xyz[:, :, None, :] - xyz[:, None, :, :]) ** 2, axis=-1)
    within = d2 < radius * radius                                # (B, M, N)
    order = jnp.where(within, jnp.arange(N)[None, None, :], N)
    sorted_idx = jnp.argsort(order, axis=-1)[:, :, :nsample].astype(jnp.int32)
    cnt = jnp.sum(within, axis=-1)                               # (B, M)
    slot_valid = jnp.arange(nsample)[None, None, :] < cnt[:, :, None]
    idx = jnp.where(slot_valid, sorted_idx, sorted_idx[:, :, :1])
    idx = jnp.where(cnt[:, :, None] > 0, idx, 0)
    idn = slot_valid.astype(jnp.float32)                         # (B, M, nsample)

    bidx = jnp.arange(B)[:, None, None]
    grouped_xyz = xyz[bidx, idx]                                 # (B, M, ns, 3)
    rel_xyz = grouped_xyz - new_xyz[:, :, None, :]
    feats_nc = jnp.transpose(features, (0, 2, 1))                # (B, N, C)
    grouped_feats = feats_nc[bidx, idx]                          # (B, M, ns, C)
    return rel_xyz, grouped_feats, idn


def _precompute_inv_dist_weights(rel_xyz, idn):
    """Reference weight math (torch.norm / 1/(d+eps) / _idn / norm / idn_mask),
    hoisted out of the kernel so no lane-width-1 sqrt/divide/reduce chains run
    on the TPU VPU/XLU critical path."""
    f32 = jnp.float32
    dist = jnp.sqrt(jnp.sum(rel_xyz * rel_xyz, axis=-1))         # (B, M, NS)
    dist_recip = 1.0 / (dist + 1e-8)
    idn_sum = jnp.sum(idn, axis=2)                               # (B, M)
    idn_mask = (idn_sum > 0).astype(f32)[:, :, None]             # (B, M, 1)
    _idn = jnp.where(idn_mask > 0, idn, 1.0)                     # (B, M, NS)
    # Mirrors the PyTorch `dist_recip /= _idn` exactly (including its behavior
    # for partially-filled neighborhoods, which the benchmark never hits).
    # TODO(synk): confirm QueryAndGroup's idn semantics; a multiplicative mask
    # may be the intended behavior for partially-filled neighborhoods.
    dist_recip = dist_recip / _idn
    norm = jnp.sum(dist_recip, axis=2, keepdims=True)            # (B, M, 1)
    weights = (dist_recip / norm) * idn_mask                     # (B, M, NS)
    return weights


def _pack_params(params, C, CQ, H, XC):
    """Pack the 12 small 1x1-conv weights/biases into 2 bf16 slabs + 1 f32 bias slab."""
    wq, bq = params["q"]        # (CQ, C)
    wadf, badf = params["adf"]  # (C, C)
    wadx, badx = params["adx"]  # (3, C)
    wm1, bm1 = params["m1"]     # (C, H)
    wm2, bm2 = params["m2"]     # (H, C)
    wx, bx = params["x"]        # (3, XC)

    KIN = 3 + C
    NBIG = C + XC + C + H

    # Block-diagonal fused weight for the big dot:
    #   rows 0:3   -> cols [0:C]=ad_xyz , [C:C+XC]=xyz_mlp
    #   rows 3:3+C -> cols [C+XC:C+XC+C]=ad_feats (raw) , [C+XC+C:]=SharedMLP l1
    wbig = jnp.zeros((KIN, NBIG), jnp.float32)
    wbig = (wbig.at[0:3, 0:C].set(wadx)
                .at[0:3, C:C + XC].set(wx)
                .at[3:3 + C, C + XC:C + XC + C].set(wadf)
                .at[3:3 + C, C + XC + C:].set(wm1))

    # Small slab for the query-side chain + SharedMLP layer 2 (cols = C),
    # with 16-row (bf16-tile) aligned segment starts.
    CQp, Cp, Hp = _round_up(CQ, 16), _round_up(C, 16), _round_up(H, 16)
    o_wadf, o_wm2 = CQp, CQp + Cp
    wsml = jnp.zeros((CQp + Cp + Hp, C), jnp.float32)
    wsml = (wsml.at[0:CQ].set(wq)
                 .at[o_wadf:o_wadf + C].set(wadf)
                 .at[o_wm2:o_wm2 + H].set(wm2))

    BW = max(NBIG, C)
    bs = jnp.zeros((8, BW), jnp.float32)
    b_big = jnp.concatenate(
        [badx, bx, jnp.zeros((1, C), jnp.float32), bm1], axis=1)[0]   # (NBIG,)
    bs = (bs.at[0, 0:NBIG].set(b_big)
            .at[1, 0:C].set(bq[0])
            .at[2, 0:C].set(badf[0])
            .at[3, 0:C].set(bm2[0]))

    return (wbig.astype(jnp.bfloat16), wsml.astype(jnp.bfloat16), bs,
            o_wadf, o_wm2)


def _choose_row_tile(total_rows):
    """Query rows per grid step after folding batch into the row dimension.

    Prefer the biggest tile <= 1024 that divides total_rows, is a multiple of 8
    (block-shape alignment), and leaves >= 2 grid steps so both v7x TensorCores
    get work.  Per-row VMEM footprint is ~1 KiB so even MT=1024 is a few MiB —
    comfortably inside v7x's 64 MiB (and trivially inside v5e/v6e's 128 MiB).
    """
    cap = min(total_rows, 1024)
    for mt in range(cap, 0, -1):
        if total_rows % mt == 0 and mt % 8 == 0 and total_rows // mt >= 2:
            return mt
    return total_rows   # fall back to a single grid step over everything


def init_params(key, query_ch, neigh_ch, mlp_hidden, xyz_out=16):
    """Deterministic synthetic weights (1x1 convs stored as (Cin, Cout))."""
    def lin(k, cin, cout):
        kw, kb = jax.random.split(k)
        w = jax.random.normal(kw, (cin, cout), jnp.float32) * 0.1
        b = jax.random.normal(kb, (1, cout), jnp.float32) * 0.01
        return w, b
    ks = jax.random.split(key, 6)
    return {
        "q":   lin(ks[0], query_ch, neigh_ch),
        "adf": lin(ks[1], neigh_ch, neigh_ch),
        "adx": lin(ks[2], 3, neigh_ch),
        "m1":  lin(ks[3], neigh_ch, mlp_hidden),
        "m2":  lin(ks[4], mlp_hidden, neigh_ch),
        "x":   lin(ks[5], 3, xyz_out),
    }


def grouper5_forward(xyz, new_xyz, features, query_features, params,
                     radius, nsample):
    B, N, _ = xyz.shape
    M = new_xyz.shape[1]
    C = features.shape[1]
    CQ = query_features.shape[1]
    NS = nsample
    H = params["m1"][0].shape[1]
    XC = params["x"][0].shape[1]
    NBIG = C + XC + C + H

    # Ball query + grouping (data-dependent gather -> plain JAX glue).
    rel_xyz, grouped_feats, idn = ball_query_and_group(
        xyz, new_xyz, features, radius, NS)
    weights = _precompute_inv_dist_weights(rel_xyz.astype(jnp.float32), idn)

    # Fold batch into rows: TR query rows, R = TR * NS neighbor rows.
    TR = B * M
    R = TR * NS
    xin = jnp.concatenate([rel_xyz, grouped_feats],
                          axis=-1).reshape(R, 3 + C).astype(jnp.bfloat16)
    w_flat = weights.reshape(R, 1).astype(jnp.float32)
    qf = jnp.transpose(query_features, (0, 2, 1)).reshape(TR, CQ).astype(jnp.bfloat16)

    wbig, wsml, bs, o_wadf, o_wm2 = _pack_params(params, C, CQ, H, XC)

    MT = _choose_row_tile(TR)
    grid = (TR // MT,)

    kernel = functools.partial(
        grouper5_kernel, MT=MT, NS=NS, C=C, CQ=CQ, H=H, XC=XC,
        o_wadf=o_wadf, o_wm2=o_wm2)

    row = lambda i: (i, 0)
    res = lambda i: (0, 0)
    in_specs = [
        pl.BlockSpec((MT * NS, 3 + C), row),   # [rel | feats] (bf16)
        pl.BlockSpec((MT * NS, 1), row),       # precomputed inv-dist weights
        pl.BlockSpec((MT, CQ), row),           # query features (bf16)
        pl.BlockSpec(wbig.shape, res),         # fused block-diag weight (resident)
        pl.BlockSpec(wsml.shape, res),         # small weight slab (resident)
        pl.BlockSpec(bs.shape, res),           # bias slab (resident)
    ]
    out_specs = pl.BlockSpec((MT, XC + C), row)
    out_shape = jax.ShapeDtypeStruct((TR, XC + C), jnp.float32)

    flops = (2 * R * (3 + C) * NBIG        # fused block-diagonal dot
             + 2 * TR * CQ * C             # query MLP
             + 2 * TR * C * C              # q_out @ Wadf
             + 2 * R * H * C               # SharedMLP layer 2
             + 12 * R * C)                 # elementwise tail (approx)
    bytes_accessed = (xin.size * 2 + w_flat.size * 4 + qf.size * 2
                      + wbig.size * 2 + wsml.size * 2 + bs.size * 4
                      + TR * (XC + C) * 4)

    out = pl.pallas_call(
        kernel,
        grid=grid,
        in_specs=in_specs,
        out_specs=out_specs,
        out_shape=out_shape,
        compiler_params=pltpu.CompilerParams(
            dimension_semantics=("parallel",)),
        cost_estimate=pl.CostEstimate(
            flops=flops, transcendentals=0, bytes_accessed=bytes_accessed),
    )(xin, w_flat, qf, wbig, wsml, bs)

    # [xyz-branch(XC) | feature-branch(C)] in the PyTorch (B, C_out, M) layout.
    # TODO(synk): for production M >= 128, store lane-dense channels-first
    # blocks directly from the kernel (unmasked vst) and drop this transpose.
    new_features = jnp.transpose(out.reshape(B, M, XC + C), (0, 2, 1))
    return new_xyz, new_features


if __name__ == "__main__":
    key = jax.random.PRNGKey(0)
    kx, knx, kf, kq, kp = jax.random.split(key, 5)

    B, N, M = 2, 64, 16
    neigh_ch, query_ch, nsample = 32, 16, 8
    radius = 2.0   # covers the unit cube -> every query has >= nsample real neighbors

    xyz = jax.random.uniform(kx, (B, N, 3), jnp.float32)             # points
    new_xyz = jax.random.uniform(knx, (B, M, 3), jnp.float32)        # query points
    features = jax.random.normal(kf, (B, neigh_ch, N), jnp.float32)         # (B, C, N)
    query_features = jax.random.normal(kq, (B, query_ch, M), jnp.float32)   # (B, CQ, M)

    # mlps = [[neigh_ch, 32]] -> SharedMLP spec [neigh_ch, 32, neigh_ch]
    params = init_params(kp, query_ch, neigh_ch, mlp_hidden=32, xyz_out=16)

    out_xyz, out_feats = grouper5_forward(
        xyz, new_xyz, features, query_features, params, radius, nsample)
    out_feats = jax.block_until_ready(out_feats)

    assert out_xyz.shape == (B, M, 3)
    assert out_feats.shape == (B, 16 + neigh_ch, M)
    assert bool(jnp.all(jnp.isfinite(out_feats)))
    print("KERNEL_OK")
</pallas_src>

<mosaic_0001>
module attributes {stable_mosaic.version = 11 : i64} {
  func.func @grouper5_kernel(%arg0: i32, %arg1: memref<128x35xbf16, #tpu.memory_space<vmem>>, %arg2: memref<128x1xf32, #tpu.memory_space<vmem>>, %arg3: memref<16x16xbf16, #tpu.memory_space<vmem>>, %arg4: memref<35x112xbf16, #tpu.memory_space<vmem>>, %arg5: memref<80x32xbf16, #tpu.memory_space<vmem>>, %arg6: memref<8x112xf32, #tpu.memory_space<vmem>>, %arg7: memref<16x48xf32, #tpu.memory_space<vmem>>) attributes {dimension_semantics = [#tpu.dimension_semantics<parallel>], iteration_bounds = array<i64: 2>, scalar_prefetch = 0 : i64, scratch_operands = 0 : i64, tpu.core_type = #tpu.core_type<tc>, window_params = [{transform_indices = @transform_0, window_bounds = array<i64: 128, 35>}, {transform_indices = @transform_1, window_bounds = array<i64: 128, 1>}, {transform_indices = @transform_2, window_bounds = array<i64: 16, 16>}, {pipeline_mode = #tpu.pipeline_mode<synchronous>, transform_indices = @transform_3, window_bounds = array<i64: 35, 112>}, {pipeline_mode = #tpu.pipeline_mode<synchronous>, transform_indices = @transform_4, window_bounds = array<i64: 80, 32>}, {pipeline_mode = #tpu.pipeline_mode<synchronous>, transform_indices = @transform_5, window_bounds = array<i64: 8, 112>}, {transform_indices = @transform_6, window_bounds = array<i64: 16, 48>}]} {
    %c0 = arith.constant 0 : index
    %c0_0 = arith.constant 0 : index
    %0 = vector.load %arg1[%c0, %c0_0] : memref<128x35xbf16, #tpu.memory_space<vmem>>, vector<128x35xbf16>
    %c0_1 = arith.constant 0 : index
    %c0_2 = arith.constant 0 : index
    %1 = vector.load %arg2[%c0_1, %c0_2] : memref<128x1xf32, #tpu.memory_space<vmem>>, vector<128x1xf32>
    %c0_3 = arith.constant 0 : index
    %c0_4 = arith.constant 0 : index
    %2 = vector.load %arg3[%c0_3, %c0_4] : memref<16x16xbf16, #tpu.memory_space<vmem>>, vector<16x16xbf16>
    %c0_5 = arith.constant 0 : index
    %c0_6 = arith.constant 0 : index
    %3 = vector.load %arg5[%c0_5, %c0_6] : memref<80x32xbf16, #tpu.memory_space<vmem>>, vector<16x32xbf16>
    %c16 = arith.constant 16 : index
    %c0_7 = arith.constant 0 : index
    %4 = vector.load %arg5[%c16, %c0_7] : memref<80x32xbf16, #tpu.memory_space<vmem>>, vector<32x32xbf16>
    %c48 = arith.constant 48 : index
    %c0_8 = arith.constant 0 : index
    %5 = vector.load %arg5[%c48, %c0_8] : memref<80x32xbf16, #tpu.memory_space<vmem>>, vector<32x32xbf16>
    %c0_9 = arith.constant 0 : index
    %c0_10 = arith.constant 0 : index
    %6 = vector.load %arg6[%c0_9, %c0_10] : memref<8x112xf32, #tpu.memory_space<vmem>>, vector<1x112xf32>
    %c1 = arith.constant 1 : index
    %c0_11 = arith.constant 0 : index
    %7 = vector.load %arg6[%c1, %c0_11] : memref<8x112xf32, #tpu.memory_space<vmem>>, vector<1x32xf32>
    %c2 = arith.constant 2 : index
    %c0_12 = arith.constant 0 : index
    %8 = vector.load %arg6[%c2, %c0_12] : memref<8x112xf32, #tpu.memory_space<vmem>>, vector<1x32xf32>
    %c3 = arith.constant 3 : index
    %c0_13 = arith.constant 0 : index
    %9 = vector.load %arg6[%c3, %c0_13] : memref<8x112xf32, #tpu.memory_space<vmem>>, vector<1x32xf32>
    %c0_14 = arith.constant 0 : index
    %c0_15 = arith.constant 0 : index
    %10 = vector.load %arg4[%c0_14, %c0_15] : memref<35x112xbf16, #tpu.memory_space<vmem>>, vector<35x112xbf16>
    %cst = arith.constant dense<0.000000e+00> : vector<128x112xf32>
    %11 = tpu.matmul %0, %10, %cst {dimension_numbers = #tpu.dot_dimension_numbers<[1], [0], [0], [1], [0, 0, 1, 1], [], []>} : vector<128x35xbf16>, vector<35x112xbf16>, vector<128x112xf32> -> vector<128x112xf32>
    %12 = vector.broadcast %6 : vector<1x112xf32> to vector<128x112xf32>
    %13 = arith.addf %11, %12 : vector<128x112xf32>
    %14 = vector.extract_strided_slice %13 {offsets = [0, 0], sizes = [128, 32], strides = [1, 1]} : vector<128x112xf32> to vector<128x32xf32>
    %cst_16 = arith.constant 0.000000e+00 : f32
    %15 = vector.broadcast %cst_16 : f32 to vector<128x32xf32>
    %16 = arith.maximumf %14, %15 : vector<128x32xf32>
    %17 = vector.extract_strided_slice %13 {offsets = [0, 32], sizes = [128, 16], strides = [1, 1]} : vector<128x112xf32> to vector<128x16xf32>
    %cst_17 = arith.constant 0.000000e+00 : f32
    %18 = vector.broadcast %cst_17 : f32 to vector<128x16xf32>
    %19 = arith.maximumf %17, %18 : vector<128x16xf32>
    %20 = vector.extract_strided_slice %13 {offsets = [0, 48], sizes = [128, 32], strides = [1, 1]} : vector<128x112xf32> to vector<128x32xf32>
    %21 = vector.extract_strided_slice %13 {offsets = [0, 80], sizes = [128, 32], strides = [1, 1]} : vector<128x112xf32> to vector<128x32xf32>
    %cst_18 = arith.constant 0.000000e+00 : f32
    %22 = vector.broadcast %cst_18 : f32 to vector<128x32xf32>
    %23 = arith.maximumf %21, %22 : vector<128x32xf32>
    %cst_19 = arith.constant dense<0.000000e+00> : vector<16x32xf32>
    %24 = tpu.matmul %2, %3, %cst_19 {dimension_numbers = #tpu.dot_dimension_numbers<[1], [0], [0], [1], [0, 0, 1, 1], [], []>} : vector<16x16xbf16>, vector<16x32xbf16>, vector<16x32xf32> -> vector<16x32xf32>
    %25 = vector.broadcast %7 : vector<1x32xf32> to vector<16x32xf32>
    %26 = arith.addf %24, %25 : vector<16x32xf32>
    %cst_20 = arith.constant 0.000000e+00 : f32
    %27 = vector.broadcast %cst_20 : f32 to vector<16x32xf32>
    %28 = arith.maximumf %26, %27 : vector<16x32xf32>
    %29 = arith.truncf %28 : vector<16x32xf32> to vector<16x32xbf16>
    %cst_21 = arith.constant dense<0.000000e+00> : vector<16x32xf32>
    %30 = tpu.matmul %29, %4, %cst_21 {dimension_numbers = #tpu.dot_dimension_numbers<[1], [0], [0], [1], [0, 0, 1, 1], [], []>} : vector<16x32xbf16>, vector<32x32xbf16>, vector<16x32xf32> -> vector<16x32xf32>
    %31 = vector.broadcast %8 : vector<1x32xf32> to vector<16x32xf32>
    %32 = arith.addf %30, %31 : vector<16x32xf32>
    %33 = vector.shape_cast %32 : vector<16x32xf32> to vector<16x1x32xf32>
    %34 = vector.shape_cast %20 : vector<128x32xf32> to vector<16x8x32xf32>
    %35 = vector.broadcast %33 : vector<16x1x32xf32> to vector<16x8x32xf32>
    %36 = arith.subf %35, %34 : vector<16x8x32xf32>
    %cst_22 = arith.constant 0.000000e+00 : f32
    %37 = vector.broadcast %cst_22 : f32 to vector<16x8x32xf32>
    %38 = arith.maximumf %36, %37 : vector<16x8x32xf32>
    %39 = vector.shape_cast %38 : vector<16x8x32xf32> to vector<128x32xf32>
    %40 = arith.truncf %23 : vector<128x32xf32> to vector<128x32xbf16>
    %cst_23 = arith.constant dense<0.000000e+00> : vector<128x32xf32>
    %41 = tpu.matmul %40, %5, %cst_23 {dimension_numbers = #tpu.dot_dimension_numbers<[1], [0], [0], [1], [0, 0, 1, 1], [], []>} : vector<128x32xbf16>, vector<32x32xbf16>, vector<128x32xf32> -> vector<128x32xf32>
    %42 = vector.broadcast %9 : vector<1x32xf32> to vector<128x32xf32>
    %43 = arith.addf %41, %42 : vector<128x32xf32>
    %cst_24 = arith.constant 0.000000e+00 : f32
    %44 = vector.broadcast %cst_24 : f32 to vector<128x32xf32>
    %45 = arith.maximumf %43, %44 : vector<128x32xf32>
    %46 = vector.broadcast %1 : vector<128x1xf32> to vector<128x32xf32>
    %47 = arith.mulf %46, %45 : vector<128x32xf32>
    %48 = arith.mulf %39, %16 : vector<128x32xf32>
    %49 = arith.mulf %47, %48 : vector<128x32xf32>
    %50 = vector.shape_cast %49 : vector<128x32xf32> to vector<16x8x32xf32>
    %cst_25 = arith.constant dense<0.000000e+00> : vector<16x32xf32>
    %51 = vector.multi_reduction <add>, %50, %cst_25 [1] : vector<16x8x32xf32> to vector<16x32xf32>
    %c0_26 = arith.constant 0 : index
    %c16_27 = arith.constant 16 : index
    %52 = vector.load %arg7[%c0_26, %c16_27] : memref<16x48xf32, #tpu.memory_space<vmem>>, vector<16x32xf32>
    tpu.vector_store %arg7[%c0_26, %c16_27], %51 {strides = array<i32>} : memref<16x48xf32, #tpu.memory_space<vmem>>, vector<16x32xf32>,
    %53 = vector.shape_cast %19 : vector<128x16xf32> to vector<16x8x16xf32>
    %cst_28 = arith.constant dense<0xFF800000> : vector<16x16xf32>
    %54 = vector.multi_reduction <maximumf>, %53, %cst_28 [1] : vector<16x8x16xf32> to vector<16x16xf32>
    %c0_29 = arith.constant 0 : index
    %c0_30 = arith.constant 0 : index
    %55 = vector.load %arg7[%c0_29, %c0_30] : memref<16x48xf32, #tpu.memory_space<vmem>>, vector<16x16xf32>
    tpu.vector_store %arg7[%c0_29, %c0_30], %54 {strides = array<i32>} : memref<16x48xf32, #tpu.memory_space<vmem>>, vector<16x16xf32>,
    return
  }
  func.func @transform_0(%arg0: i32) -> (i32, i32) {
    %c0_i32 = arith.constant 0 : i32
    %c0_i32_0 = arith.constant 0 : i32
    return %arg0, %c0_i32 : i32, i32
  }
  func.func @transform_1(%arg0: i32) -> (i32, i32) {
    %c0_i32 = arith.constant 0 : i32
    %c0_i32_0 = arith.constant 0 : i32
    return %arg0, %c0_i32 : i32, i32
  }
  func.func @transform_2(%arg0: i32) -> (i32, i32) {
    %c0_i32 = arith.constant 0 : i32
    %c0_i32_0 = arith.constant 0 : i32
    return %arg0, %c0_i32 : i32, i32
  }
  func.func @transform_3(%arg0: i32) -> (i32, i32) {
    %c0_i32 = arith.constant 0 : i32
    %c0_i32_0 = arith.constant 0 : i32
    %c0_i32_1 = arith.constant 0 : i32
    return %c0_i32, %c0_i32_0 : i32, i32
  }
  func.func @transform_4(%arg0: i32) -> (i32, i32) {
    %c0_i32 = arith.constant 0 : i32
    %c0_i32_0 = arith.constant 0 : i32
    %c0_i32_1 = arith.constant 0 : i32
    return %c0_i32, %c0_i32_0 : i32, i32
  }
  func.func @transform_5(%arg0: i32) -> (i32, i32) {
    %c0_i32 = arith.constant 0 : i32
    %c0_i32_0 = arith.constant 0 : i32
    %c0_i32_1 = arith.constant 0 : i32
    return %c0_i32, %c0_i32_0 : i32, i32
  }
  func.func @transform_6(%arg0: i32) -> (i32, i32) {
    %c0_i32 = arith.constant 0 : i32
    %c0_i32_0 = arith.constant 0 : i32
    return %arg0, %c0_i32 : i32, i32
  }
}

</mosaic_0001>

<llo_original>
// kernel: tpu_custom_call.1
$region0: #{tpu_custom_call.1}
  #allocation0 [shape = 'u32[]', space=smem, size = 0x4, offset = 0x4, fixed_abs, tag = 'smem constant byte address 0x4 - core index']
  #allocation1 [shape = 'u32[72,128]{1,0:T(1,128)}', space=vmem, size = 0x9000, scoped, tag = 'internal scratch']
  %s0 = inlined_call_operand.vmem [shape: bf16[256,35], index: 0, kind: input, shape index: {}]
  %s1 = inlined_call_operand.vmem [shape: f32[256,1], index: 1, kind: input, shape index: {}]
  %s2 = inlined_call_operand.vmem [shape: bf16[32,16], index: 2, kind: input, shape index: {}]
  %s3 = inlined_call_operand.vmem [shape: bf16[35,112], index: 3, kind: input, shape index: {}]
  %s4 = inlined_call_operand.vmem [shape: bf16[80,32], index: 4, kind: input, shape index: {}]
  %s5 = inlined_call_operand.vmem [shape: f32[8,112], index: 5, kind: input, shape index: {}]
  %s6 = inlined_call_operand.hbm [shape: f32[32,48], index: 6, kind: output, shape index: {}]
  %s7 = sld [smem:[#allocation0]]
  $region57: #{tpu_custom_call.1} parent=0
    _
  %s9 = ssub.s32 1, %s7
  %s10 = scalar_select 0, %s9, %s7
  $region1: #{tpu_custom_call.1} parent=0
    #allocation2 [shape = 'u8[16384]{0}', space=vmem, size = 0x4000, scoped, tag = 'output window, operand 0']
    #allocation3 [shape = 's32[2]{0}', space=sflag, size = 0x8, scoped, tag = 'scoped memory for tpu_custom_call.1']
    %11 = vsyncpa [#allocation3], 0
    %s12 = scalar_lea.sflag [#allocation3], 1
    %13 = vsyncpa %s12, 0
    loop: start=0, step=1, limit=4
    $region2: #{tpu_custom_call.1} parent=1 // loop_pre_header
      _
    $region3: #{tpu_custom_call.1} parent=1 // loop_header
      %s15 = sphi 0, %s19
      %p16 = scmp.ge.s32.totalorder %s15, 4
      %s25 = sphi 0, %s27
      %s28 = sphi 0, %s25
      %s29 = sphi 0, %s28
      %s45 = sphi 0, %s29
      %s51 = sphi 0, %s53
      %s54 = sphi 0, %s51
      %s55 = sphi 0, %s54
      %s71 = sphi 0, %s55
      %s77 = sphi 0, %s79
      %s80 = sphi 0, %s77
      %s81 = sphi 0, %s80
      %s97 = sphi 0, %s81
      %s101 = sphi 0, %s101
      %s103 = sphi 0, %s101
      %s104 = sphi 0, %s103
      %s118 = sphi 0, %s104
      %s122 = sphi 0, %s122
      %s124 = sphi 0, %s122
      %s125 = sphi 0, %s124
      %s139 = sphi 0, %s125
      %s143 = sphi 0, %s143
      %s145 = sphi 0, %s143
      %s146 = sphi 0, %s145
      %s160 = sphi 0, %s146
      %s166 = sphi 0, %s168
      %s169 = sphi 0, %s166
      %s170 = sphi 0, %s169
      %s186 = sphi 0, %s170
    $region4: #{tpu_custom_call.1} parent=1 // loop_header_branch
      %18 = sbr.rel (%p16) target = $region8
    $region5: #{tpu_custom_call.1} parent=1 // loop_body
      %s20 = ssub.s32 %s15, 1
      %s21 = ssub.s32 %s15, 2
      %s22 = sadd.s32 %s15, 1
      %s23 = ssub.s32 %s15, %s22
      %p24 = scmp.eq.s32.totalorder %s23, 0
      %s26 = sadd.s32 %s25, 1
      %s27 = scalar_select %p24, %s25, %s26
      %p30 = pneg %p24
      %p31 = scmp.eq.s32.totalorder %s15, 1
      %p32 = por %p30, %p31
      %p33 = scmp.ne.s32.totalorder %s25, %s28
      %p34 = scmp.eq.s32.totalorder %s15, 0
      %p35 = por %p33, %p34
      %p36 = scmp.ne.s32.totalorder %s25, %s28
      %p37 = scmp.eq.s32.totalorder %s20, 1
      %p38 = por %p36, %p37
      %p39 = scmp.ne.s32.totalorder %s28, %s29
      %p40 = scmp.eq.s32.totalorder %s20, 0
      %p41 = por %p39, %p40
      %p42 = scmp.ne.s32.totalorder %s28, %s29
      %p43 = scmp.eq.s32.totalorder %s21, 1
      %p44 = por %p42, %p43
      %p46 = scmp.ne.s32.totalorder %s29, %s45
      %p47 = scmp.eq.s32.totalorder %s21, 0
      %p48 = por %p46, %p47
      %s49 = ssub.s32 %s15, %s22
      %p50 = scmp.eq.s32.totalorder %s49, 0
      %s52 = sadd.s32 %s51, 1
      %s53 = scalar_select %p50, %s51, %s52
      %p56 = pneg %p50
      %p57 = scmp.eq.s32.totalorder %s15, 1
      %p58 = por %p56, %p57
      %p59 = scmp.ne.s32.totalorder %s51, %s54
      %p60 = scmp.eq.s32.totalorder %s15, 0
      %p61 = por %p59, %p60
      %p62 = scmp.ne.s32.totalorder %s51, %s54
      %p63 = scmp.eq.s32.totalorder %s20, 1
      %p64 = por %p62, %p63
      %p65 = scmp.ne.s32.totalorder %s54, %s55
      %p66 = scmp.eq.s32.totalorder %s20, 0
      %p67 = por %p65, %p66
      %p68 = scmp.ne.s32.totalorder %s54, %s55
      %p69 = scmp.eq.s32.totalorder %s21, 1
      %p70 = por %p68, %p69
      %p72 = scmp.ne.s32.totalorder %s55, %s71
      %p73 = scmp.eq.s32.totalorder %s21, 0
      %p74 = por %p72, %p73
      %s75 = ssub.s32 %s15, %s22
      %p76 = scmp.eq.s32.totalorder %s75, 0
      %s78 = sadd.s32 %s77, 1
      %s79 = scalar_select %p76, %s77, %s78
      %p82 = pneg %p76
      %p83 = scmp.eq.s32.totalorder %s15, 1
      %p84 = por %p82, %p83
      %p85 = scmp.ne.s32.totalorder %s77, %s80
      %p86 = scmp.eq.s32.totalorder %s15, 0
      %p87 = por %p85, %p86
      %p88 = scmp.ne.s32.totalorder %s77, %s80
      %p89 = scmp.eq.s32.totalorder %s20, 1
      %p90 = por %p88, %p89
      %p91 = scmp.ne.s32.totalorder %s80, %s81
      %p92 = scmp.eq.s32.totalorder %s20, 0
      %p93 = por %p91, %p92
      %p94 = scmp.ne.s32.totalorder %s80, %s81
      %p95 = scmp.eq.s32.totalorder %s21, 1
      %p96 = por %p94, %p95
      %p98 = scmp.ne.s32.totalorder %s81, %s97
      %p99 = scmp.eq.s32.totalorder %s21, 0
      %p100 = por %p98, %p99
      %s102 = sadd.s32 %s101, 1
      %p105 = scmp.eq.s32.totalorder %s15, 1
      %p106 = scmp.ne.s32.totalorder %s101, %s103
      %p107 = scmp.eq.s32.totalorder %s15, 0
      %p108 = por %p106, %p107
      %p109 = scmp.ne.s32.totalorder %s101, %s103
      %p110 = scmp.eq.s32.totalorder %s20, 1
      %p111 = por %p109, %p110
      %p112 = scmp.ne.s32.totalorder %s103, %s104
      %p113 = scmp.eq.s32.totalorder %s20, 0
      %p114 = por %p112, %p113
      %p115 = scmp.ne.s32.totalorder %s103, %s104
      %p116 = scmp.eq.s32.totalorder %s21, 1
      %p117 = por %p115, %p116
      %p119 = scmp.ne.s32.totalorder %s104, %s118
      %p120 = scmp.eq.s32.totalorder %s21, 0
      %p121 = por %p119, %p120
      %s123 = sadd.s32 %s122, 1
      %p126 = scmp.eq.s32.totalorder %s15, 1
      %p127 = scmp.ne.s32.totalorder %s122, %s124
      %p128 = scmp.eq.s32.totalorder %s15, 0
      %p129 = por %p127, %p128
      %p130 = scmp.ne.s32.totalorder %s122, %s124
      %p131 = scmp.eq.s32.totalorder %s20, 1
      %p132 = por %p130, %p131
      %p133 = scmp.ne.s32.totalorder %s124, %s125
      %p134 = scmp.eq.s32.totalorder %s20, 0
      %p135 = por %p133, %p134
      %p136 = scmp.ne.s32.totalorder %s124, %s125
      %p137 = scmp.eq.s32.totalorder %s21, 1
      %p138 = por %p136, %p137
      %p140 = scmp.ne.s32.totalorder %s125, %s139
      %p141 = scmp.eq.s32.totalorder %s21, 0
      %p142 = por %p140, %p141
      %s144 = sadd.s32 %s143, 1
      %p147 = scmp.eq.s32.totalorder %s15, 1
      %p148 = scmp.ne.s32.totalorder %s143, %s145
      %p149 = scmp.eq.s32.totalorder %s15, 0
      %p150 = por %p148, %p149
      %p151 = scmp.ne.s32.totalorder %s143, %s145
      %p152 = scmp.eq.s32.totalorder %s20, 1
      %p153 = por %p151, %p152
      %p154 = scmp.ne.s32.totalorder %s145, %s146
      %p155 = scmp.eq.s32.totalorder %s20, 0
      %p156 = por %p154, %p155
      %p157 = scmp.ne.s32.totalorder %s145, %s146
      %p158 = scmp.eq.s32.totalorder %s21, 1
      %p159 = por %p157, %p158
      %p161 = scmp.ne.s32.totalorder %s146, %s160
      %p162 = scmp.eq.s32.totalorder %s21, 0
      %p163 = por %p161, %p162
      %s164 = ssub.s32 %s15, %s22
      %p165 = scmp.eq.s32.totalorder %s164, 0
      %s167 = sadd.s32 %s166, 1
      %s168 = scalar_select %p165, %s166, %s167
      %p171 = pneg %p165
      %p172 = scmp.eq.s32.totalorder %s15, 1
      %p173 = por %p171, %p172
      %p174 = scmp.ne.s32.totalorder %s166, %s169
      %p175 = scmp.eq.s32.totalorder %s15, 0
      %p176 = por %p174, %p175
      %p177 = scmp.ne.s32.totalorder %s166, %s169
      %p178 = scmp.eq.s32.totalorder %s20, 1
      %p179 = por %p177, %p178
      %p180 = scmp.ne.s32.totalorder %s169, %s170
      %p181 = scmp.eq.s32.totalorder %s20, 0
      %p182 = por %p180, %p181
      %p183 = scmp.ne.s32.totalorder %s169, %s170
      %p184 = scmp.eq.s32.totalorder %s21, 1
      %p185 = por %p183, %p184
      %p187 = scmp.ne.s32.totalorder %s170, %s186
      %p188 = scmp.eq.s32.totalorder %s21, 0
      %p189 = por %p187, %p188
      %p190 = scmp.le.s32.totalorder 1, %s15
      %p191 = scmp.lt.s32.totalorder %s15, 3
      %p192 = pnand %p190, %p191
      %p193 = pneg %p192
      // Predicated region
      $region9: #{tpu_custom_call.1} parent=5 // pred_check
        _
      $region10: #{tpu_custom_call.1} parent=5 // pred_check_branch
        %195 = sbr.rel (%p192) target = $region12
      $region11: #{tpu_custom_call.1} parent=5 // pred_region
        %s196 = ssub.s32 %s15, 1
        // Predicated region
        $region13: #{tpu_custom_call.1} parent=11 // pred_check
          %p197 = pneg %p114
        $region14: #{tpu_custom_call.1} parent=11 // pred_check_branch
          %199 = sbr.rel (%p197) target = $region16
        $region15: #{tpu_custom_call.1} parent=11 // pred_region
          _
        $region16: #{tpu_custom_call.1} parent=11 // pred_fallthru
          _
        // Predicated region
        $region17: #{tpu_custom_call.1} parent=11 // pred_check
          %p200 = pneg %p135
        $region18: #{tpu_custom_call.1} parent=11 // pred_check_branch
          %202 = sbr.rel (%p200) target = $region20
        $region19: #{tpu_custom_call.1} parent=11 // pred_region
          _
        $region20: #{tpu_custom_call.1} parent=11 // pred_fallthru
          _
        // Predicated region
        $region21: #{tpu_custom_call.1} parent=11 // pred_check
          %p203 = pneg %p156
        $region22: #{tpu_custom_call.1} parent=11 // pred_check_branch
          %205 = sbr.rel (%p203) target = $region24
        $region23: #{tpu_custom_call.1} parent=11 // pred_region
          _
        $region24: #{tpu_custom_call.1} parent=11 // pred_fallthru
          _
      $region12: #{tpu_custom_call.1} parent=5 // pred_fallthru
        _
      %p206 = scmp.lt.s32.totalorder %s15, 2
      // Predicated region
      $region25: #{tpu_custom_call.1} parent=5 // pred_check
        %p207 = pneg %p206
      $region26: #{tpu_custom_call.1} parent=5 // pred_check_branch
        %209 = sbr.rel (%p207) target = $region28
      $region27: #{tpu_custom_call.1} parent=5 // pred_region
        // Predicated region
        $region29: #{tpu_custom_call.1} parent=27 // pred_check
          %p210 = pneg %p35
        $region30: #{tpu_custom_call.1} parent=27 // pred_check_branch
          %212 = sbr.rel (%p210) target = $region32
        $region31: #{tpu_custom_call.1} parent=27 // pred_region
          %s213 = smul.u32 16, %s15
          %p214 = scmp.lt.s32.totalorder %s213, 31
          %s215 = scalar_select %p214, %s213, 31
          %s216 = smul.addr %s215, 4
          %s217 = scalar_lea.vmem %s0, %s216
          %s218 = smul.u32 16, %s15
        $region32: #{tpu_custom_call.1} parent=27 // pred_fallthru
          _
        // Predicated region
        $region33: #{tpu_custom_call.1} parent=27 // pred_check
          %p219 = pneg %p61
        $region34: #{tpu_custom_call.1} parent=27 // pred_check_branch
          %221 = sbr.rel (%p219) target = $region36
        $region35: #{tpu_custom_call.1} parent=27 // pred_region
          %s222 = smul.u32 16, %s15
          %p223 = scmp.lt.s32.totalorder %s222, 31
          %s224 = scalar_select %p223, %s222, 31
          %s225 = smul.addr %s224, 8
          %s226 = scalar_lea.vmem %s1, %s225
          %s227 = smul.u32 16, %s15
        $region36: #{tpu_custom_call.1} parent=27 // pred_fallthru
          _
        // Predicated region
        $region37: #{tpu_custom_call.1} parent=27 // pred_check
          %p228 = pneg %p87
        $region38: #{tpu_custom_call.1} parent=27 // pred_check_branch
          %230 = sbr.rel (%p228) target = $region40
        $region39: #{tpu_custom_call.1} parent=27 // pred_region
          %s231 = smul.u32 2, %s15
          %p232 = scmp.lt.s32.totalorder %s231, 3
          %s233 = scalar_select %p232, %s231, 3
          %s234 = smul.addr %s233, 4
          %s235 = scalar_lea.vmem %s2, %s234
          %s236 = smul.u32 2, %s15
        $region40: #{tpu_custom_call.1} parent=27 // pred_fallthru
          _
      $region28: #{tpu_custom_call.1} parent=5 // pred_fallthru
        _
      %p237 = scmp.le.s32.totalorder 1, %s15
      %p238 = scmp.lt.s32.totalorder %s15, 3
      %p239 = pnand %p237, %p238
      %p240 = pneg %p239
      // Predicated region
      $region41: #{tpu_custom_call.1} parent=5 // pred_check
        _
      $region42: #{tpu_custom_call.1} parent=5 // pred_check_branch
        %242 = sbr.rel (%p239) target = $region44
      $region43: #{tpu_custom_call.1} parent=5 // pred_region
        %s243 = ssub.s32 %s15, 1
        %s244 = smul.u32 16, %s20
        %p245 = scmp.lt.s32.totalorder %s244, 31
        %s246 = scalar_select %p245, %s244, 31
        %s247 = smul.addr %s246, 4
        %s248 = scalar_lea.vmem %s0, %s247
        %p249 = pneg %p41
        %p250 = pneg %p38
        %s251 = smul.u32 16, %s20
        %p252 = scmp.lt.s32.totalorder %s251, 31
        %s253 = scalar_select %p252, %s251, 31
        %s254 = smul.addr %s253, 8
        %s255 = scalar_lea.vmem %s1, %s254
        %p256 = pneg %p67
        %p257 = pneg %p64
        %s258 = smul.u32 2, %s20
        %p259 = scmp.lt.s32.totalorder %s258, 3
        %s260 = scalar_select %p259, %s258, 3
        %s261 = smul.addr %s260, 4
        %s262 = scalar_lea.vmem %s2, %s261
        %p263 = pneg %p93
        %p264 = pneg %p90
        %p265 = pneg %p114
        %p266 = pneg %p111
        %p267 = pneg %p135
        %p268 = pneg %p132
        %p269 = pneg %p156
        %p270 = pneg %p153
        %p271 = pneg %p182
        %p272 = pneg %p179
        %s273 = sand.u32 %s169, 1
        %s274 = scalar_lea.sflag [#allocation3], %s273
        %s275 = sand.u32 %s169, 1
        %s276 = smul.addr %s275, 16
        %s277 = scalar_lea.vmem [#allocation2], %s276
        %s278 = smul.u32 16, %s20
        %p279 = scmp.lt.s32.totalorder %s278, 31
        %s280 = scalar_select %p279, %s278, 31
        %s281 = smul.addr %s280, 4
        %s282 = scalar_lea.vmem %s0, %s281
        %s283 = smul.u32 16, %s20
        %s284 = smul.u32 16, %s20
        %p285 = scmp.lt.s32.totalorder %s284, 31
        %s286 = scalar_select %p285, %s284, 31
        %s287 = smul.addr %s286, 8
        %s288 = scalar_lea.vmem %s1, %s287
        %s289 = smul.u32 16, %s20
        %s290 = smul.u32 2, %s20
        %p291 = scmp.lt.s32.totalorder %s290, 3
        %s292 = scalar_select %p291, %s290, 3
        %s293 = smul.addr %s292, 4
        %s294 = scalar_lea.vmem %s2, %s293
        %s295 = smul.u32 2, %s20
        %s296 = smul.u32 2, %s20
        %v298 = vld [vmem:[%s282] sm:$0xf]
        %v299 = vld [vmem:[%s282 + $0x4] sm:$0xf]
        %v300 = vld [vmem:[%s282 + $0x8] sm:$0xf]
        %v301 = vld [vmem:[%s282 + $0xc] sm:$0xf]
        %v302 = vld [vmem:[%s282 + $0x10] sm:$0xf]
        %v303 = vld [vmem:[%s282 + $0x14] sm:$0xf]
        %v304 = vld [vmem:[%s282 + $0x18] sm:$0xf]
        %v305 = vld [vmem:[%s282 + $0x1c] sm:$0xf]
        %v306 = vld [vmem:[%s282 + $0x20] sm:$0xf]
        %v307 = vld [vmem:[%s282 + $0x24] sm:$0xf]
        %v308 = vld [vmem:[%s282 + $0x28] sm:$0xf]
        %v309 = vld [vmem:[%s282 + $0x2c] sm:$0xf]
        %v310 = vld [vmem:[%s282 + $0x30] sm:$0xf]
        %v311 = vld [vmem:[%s282 + $0x34] sm:$0xf]
        %v312 = vld [vmem:[%s282 + $0x38] sm:$0xf]
        %v313 = vld [vmem:[%s282 + $0x3c] sm:$0xf]
        %v314 = vld [vmem:[%s288] sm:$0xff]
        %v315 = vld [vmem:[%s288 + $0x8] sm:$0xff]
        %v316 = vld [vmem:[%s288 + $0x10] sm:$0xff]
        %v317 = vld [vmem:[%s288 + $0x18] sm:$0xff]
        %v318 = vld [vmem:[%s288 + $0x20] sm:$0xff]
        %v319 = vld [vmem:[%s288 + $0x28] sm:$0xff]
        %v320 = vld [vmem:[%s288 + $0x30] sm:$0xff]
        %v321 = vld [vmem:[%s288 + $0x38] sm:$0xff]
        %v322 = vld [vmem:[%s288 + $0x40] sm:$0xff]
        %v323 = vld [vmem:[%s288 + $0x48] sm:$0xff]
        %v324 = vld [vmem:[%s288 + $0x50] sm:$0xff]
        %v325 = vld [vmem:[%s288 + $0x58] sm:$0xff]
        %v326 = vld [vmem:[%s288 + $0x60] sm:$0xff]
        %v327 = vld [vmem:[%s288 + $0x68] sm:$0xff]
        %v328 = vld [vmem:[%s288 + $0x70] sm:$0xff]
        %v329 = vld [vmem:[%s288 + $0x78] sm:$0xff]
        %v330 = vld [vmem:[%s294] sm:$0xf]
        %v331 = vld [vmem:[%s294 + $0x4] sm:$0xf]
        %v332 = vld [vmem:[%s4] sm:$0xf]
        %v333 = vld [vmem:[%s4 + $0x4] sm:$0xf]
        %v334 = vld [vmem:[%s4 + $0x8] sm:$0xf]
        %v335 = vld [vmem:[%s4 + $0xc] sm:$0xf]
        %v336 = vld [vmem:[%s4 + $0x10] sm:$0xf]
        %v337 = vld [vmem:[%s4 + $0x14] sm:$0xf]
        %v338 = vld [vmem:[%s4 + $0x18] sm:$0xf]
        %v339 = vld [vmem:[%s4 + $0x1c] sm:$0xf]
        %v340 = vld [vmem:[%s4 + $0x20] sm:$0xf]
        %v341 = vld [vmem:[%s4 + $0x24] sm:$0xf]
        %v342 = vld [vmem:[%s5] sm:$0x1]
        %v343 = vld [vmem:[%s5 + $0x1] sm:$0x1]
        %v344 = vld [vmem:[%s5 + $0x2] sm:$0x1]
        %v345 = vld [vmem:[%s5 + $0x3] sm:$0x1]
        %v346 = vld [vmem:[%s3] sm:$0xf]
        %v347 = vld [vmem:[%s3 + $0x4] sm:$0xf]
        %v348 = vld [vmem:[%s3 + $0x8] sm:$0xf]
        %v349 = vld [vmem:[%s3 + $0xc] sm:$0xf]
        %v350 = vld [vmem:[%s3 + $0x10] sm:$0x3]
        %v351 = vperm.slane %v342, 0
        %v368 = vunpack.c.l.b16 %v298
        %v369 = vunpack.c.l.b16 %v299
        %v370 = vunpack.c.l.b16 %v300
        %v371 = vunpack.c.l.b16 %v301
        %v372 = vunpack.c.l.b16 %v302
        %v373 = vunpack.c.l.b16 %v303
        %v374 = vunpack.c.l.b16 %v304
        %v375 = vunpack.c.l.b16 %v305
        %v376 = vunpack.c.l.b16 %v306
        %v377 = vunpack.c.l.b16 %v307
        %v378 = vunpack.c.l.b16 %v308
        %v379 = vunpack.c.l.b16 %v309
        %v380 = vunpack.c.l.b16 %v310
        %v381 = vunpack.c.l.b16 %v311
        %v382 = vunpack.c.l.b16 %v312
        %v383 = vunpack.c.l.b16 %v313
        %v384 = vpack.c.b16 %v369, %v368
        %v385 = vpack.c.b16 %v371, %v370
        %v386 = vpack.c.b16 %v373, %v372
        %v387 = vpack.c.b16 %v375, %v374
        %v388 = vpack.c.b16 %v377, %v376
        %v389 = vpack.c.b16 %v379, %v378
        %v390 = vpack.c.b16 %v381, %v380
        %v391 = vpack.c.b16 %v383, %v382
        %v397 = vunpack.c.l.b16 %v346
        %v398 = vunpack.c.l.b16 %v347
        %v399 = vunpack.c.l.b16 %v348
        %v400 = vunpack.c.l.b16 %v349
        %v401 = vunpack.c.l.b16 %v350
        %v402 = vpack.c.b16 %v398, %v397
        %v403 = vpack.c.b16 %v400, %v399
        %v404 = vpack.c.b16 %v401, %v401
        %vm407 = vcmask 285696
        %v409 = vsel %vm407, %v384, 0
        %v412 = vsel %vm407, %v385, 0
        %v415 = vsel %vm407, %v386, 0
        %v418 = vsel %vm407, %v387, 0
        %v421 = vsel %vm407, %v388, 0
        %v424 = vsel %vm407, %v389, 0
        %v427 = vsel %vm407, %v390, 0
        %v430 = vsel %vm407, %v391, 0
        %vm432 = vcmask 1040384
        %vm433 = vcmask 1041408
        %v434 = vsel %vm432, 4294967295, 65535
        %v435 = vsel %vm433, %v434, 0
        %v437 = vand.u32 %v404, %v435
        %439 = vmatpush.bf16.msra.mxu0 0
        %440 = vmatpush.bf16.msra.mxu0 0
        %441 = vmatpush.bf16.msra.mxu0 0
        %442 = vmatpush.bf16.msra.mxu0 0
        %443 = vmatpush.bf16.msra.mxu0 0
        %444 = vmatpush.bf16.msra.mxu0 %v437
        %445 = vmatpush.bf16.msra.mxu0 %v403
        %446 = vmatpush.bf16.msra.mxu0 %v402
        %447 = vmatmul.bf16.gmra.mxu0 %v409
        %v448 = vpop.f32.mrf.mxu0
        %v449 = vadd.f32 %v351, %v448
        %v450 = vpop.f32.mrf.mxu0
        %v451 = vadd.f32 %v351, %v450
        %452 = vmatmul.bf16.gmra.mxu0 %v412
        %v453 = vpop.f32.mrf.mxu0
        %v454 = vadd.f32 %v351, %v453
        %v455 = vpop.f32.mrf.mxu0
        %v456 = vadd.f32 %v351, %v455
        %457 = vmatmul.bf16.gmra.mxu0 %v415
        %v458 = vpop.f32.mrf.mxu0
        %v459 = vadd.f32 %v351, %v458
        %v460 = vpop.f32.mrf.mxu0
        %v461 = vadd.f32 %v351, %v460
        %462 = vmatmul.bf16.gmra.mxu0 %v418
        %v463 = vpop.f32.mrf.mxu0
        %v464 = vadd.f32 %v351, %v463
        %v465 = vpop.f32.mrf.mxu0
        %v466 = vadd.f32 %v351, %v465
        %467 = vmatmul.bf16.gmra.mxu0 %v421
        %v468 = vpop.f32.mrf.mxu0
        %v469 = vadd.f32 %v351, %v468
        %v470 = vpop.f32.mrf.mxu0
        %v471 = vadd.f32 %v351, %v470
        %472 = vmatmul.bf16.gmra.mxu0 %v424
        %v473 = vpop.f32.mrf.mxu0
        %v474 = vadd.f32 %v351, %v473
        %v475 = vpop.f32.mrf.mxu0
        %v476 = vadd.f32 %v351, %v475
        %477 = vmatmul.bf16.gmra.mxu0 %v427
        %v478 = vpop.f32.mrf.mxu0
        %v479 = vadd.f32 %v351, %v478
        %v480 = vpop.f32.mrf.mxu0
        %v481 = vadd.f32 %v351, %v480
        %482 = vmatmul.bf16.gmra.mxu0 %v430
        %v483 = vpop.f32.mrf.mxu0
        %v484 = vadd.f32 %v351, %v483
        %v485 = vpop.f32.mrf.mxu0
        %v486 = vadd.f32 %v351, %v485
        %487 = vdwg.mxu0
        %v488 = vmax.f32 %v449, 0.0
        %v489 = vmax.f32 %v451, 0.0
        %v490 = vmax.f32 %v454, 0.0
        %v491 = vmax.f32 %v456, 0.0
        %v492 = vmax.f32 %v459, 0.0
        %v493 = vmax.f32 %v461, 0.0
        %v494 = vmax.f32 %v464, 0.0
        %v495 = vmax.f32 %v466, 0.0
        %v496 = vmax.f32 %v469, 0.0
        %v497 = vmax.f32 %v471, 0.0
        %v498 = vmax.f32 %v474, 0.0
        %v499 = vmax.f32 %v476, 0.0
        %v500 = vmax.f32 %v479, 0.0
        %v501 = vmax.f32 %v481, 0.0
        %v502 = vmax.f32 %v484, 0.0
        %v503 = vmax.f32 %v486, 0.0
        %v504 = vperm.slane %v343, 0
        %v507 = vunpack.c.l.b16 %v330
        %v508 = vunpack.c.l.b16 %v331
        %v509 = vpack.c.b16 %v508, %v507
        %v512 = vunpack.c.l.b16 %v332
        %v513 = vunpack.c.l.b16 %v333
        %v514 = vpack.c.b16 %v513, %v512
        %vm516 = vcmask 130048
        %v518 = vsel %vm516, %v509, 0
        %520 = vmatpush.bf16.msra.mxu0 0
        %521 = vmatpush.bf16.msra.mxu0 0
        %522 = vmatpush.bf16.msra.mxu0 0
        %523 = vmatpush.bf16.msra.mxu0 0
        %524 = vmatpush.bf16.msra.mxu0 0
        %525 = vmatpush.bf16.msra.mxu0 0
        %526 = vmatpush.bf16.msra.mxu0 0
        %527 = vmatpush.bf16.msra.mxu0 %v514
        %528 = vmatmul.bf16.gmra.mxu0 %v518
        %v529 = vpop.f32.mrf.mxu0
        %v530 = vadd.f32 %v504, %v529
        %v531 = vpop.f32.mrf.mxu0
        %v532 = vadd.f32 %v504, %v531
        %533 = vdwg.mxu0
        %v534 = vmax.f32 %v530, 0.0
        %v535 = vmax.f32 %v532, 0.0
        %v536 = vpack.c.bf16 %v535, %v534
        %v537 = vperm.slane %v344, 0
        %v542 = vunpack.c.l.b16 %v334
        %v543 = vunpack.c.l.b16 %v335
        %v544 = vunpack.c.l.b16 %v336
        %v545 = vunpack.c.l.b16 %v337
        %v546 = vpack.c.b16 %v543, %v542
        %v547 = vpack.c.b16 %v545, %v544
        %vm550 = vcmask 261120
        %v552 = vsel %vm550, %v536, 0
        %554 = vmatpush.bf16.msra.mxu0 0
        %555 = vmatpush.bf16.msra.mxu0 0
        %556 = vmatpush.bf16.msra.mxu0 0
        %557 = vmatpush.bf16.msra.mxu0 0
        %558 = vmatpush.bf16.msra.mxu0 0
        %559 = vmatpush.bf16.msra.mxu0 0
        %560 = vmatpush.bf16.msra.mxu0 %v547
        %561 = vmatpush.bf16.msra.mxu0 %v546
        %562 = vmatmul.bf16.gmra.mxu0 %v552
        %v563 = vpop.f32.mrf.mxu0
        %v564 = vadd.f32 %v537, %v563
        %v565 = vpop.f32.mrf.mxu0
        %v566 = vadd.f32 %v537, %v565
        %567 = vdwg.mxu0
        %v570 = vrot.slane %v564, 1
        %v571 = vrot.slane %v564, 2
        %v572 = vrot.slane %v564, 3
        %v573 = vrot.slane %v564, 4
        %v574 = vrot.slane %v564, 5
        %v575 = vrot.slane %v564, 6
        %v576 = vrot.slane %v564, 7
        %v577 = vrot.slane %v566, 1
        %v578 = vrot.slane %v566, 2
        %v579 = vrot.slane %v566, 3
        %v580 = vrot.slane %v566, 4
        %v581 = vrot.slane %v566, 5
        %v582 = vrot.slane %v566, 6
        %v583 = vrot.slane %v566, 7
        %v584 = vperm.slane %v564, 0
        %v585 = vperm.slane %v570, 0
        %v586 = vperm.slane %v571, 0
        %v587 = vperm.slane %v572, 0
        %v588 = vperm.slane %v573, 0
        %v589 = vperm.slane %v574, 0
        %v590 = vperm.slane %v575, 0
        %v591 = vperm.slane %v576, 0
        %v592 = vperm.slane %v566, 0
        %v593 = vperm.slane %v577, 0
        %v594 = vperm.slane %v578, 0
        %v595 = vperm.slane %v579, 0
        %v596 = vperm.slane %v580, 0
        %v597 = vperm.slane %v581, 0
        %v598 = vperm.slane %v582, 0
        %v599 = vperm.slane %v583, 0
        %632 = vrot.lane.b32.xlu0 %v449, 80
        %v633 = vpop.permute.xlu0 %632
        %634 = vrot.lane.b32.xlu0 %v451, 80
        %v635 = vpop.permute.xlu0 %634
        %636 = vrot.lane.b32.xlu0 %v454, 80
        %v637 = vpop.permute.xlu0 %636
        %638 = vrot.lane.b32.xlu0 %v456, 80
        %v639 = vpop.permute.xlu0 %638
        %640 = vrot.lane.b32.xlu0 %v459, 80
        %v641 = vpop.permute.xlu0 %640
        %642 = vrot.lane.b32.xlu0 %v461, 80
        %v643 = vpop.permute.xlu0 %642
        %644 = vrot.lane.b32.xlu0 %v464, 80
        %v645 = vpop.permute.xlu0 %644
        %646 = vrot.lane.b32.xlu0 %v466, 80
        %v647 = vpop.permute.xlu0 %646
        %648 = vrot.lane.b32.xlu0 %v469, 80
        %v649 = vpop.permute.xlu0 %648
        %650 = vrot.lane.b32.xlu0 %v471, 80
        %v651 = vpop.permute.xlu0 %650
        %652 = vrot.lane.b32.xlu0 %v474, 80
        %v653 = vpop.permute.xlu0 %652
        %654 = vrot.lane.b32.xlu0 %v476, 80
        %v655 = vpop.permute.xlu0 %654
        %656 = vrot.lane.b32.xlu0 %v479, 80
        %v657 = vpop.permute.xlu0 %656
        %658 = vrot.lane.b32.xlu0 %v481, 80
        %v659 = vpop.permute.xlu0 %658
        %660 = vrot.lane.b32.xlu0 %v484, 80
        %v661 = vpop.permute.xlu0 %660
        %662 = vrot.lane.b32.xlu0 %v486, 80
        %v663 = vpop.permute.xlu0 %662
        %v680 = vsub.f32 %v584, %v633
        %v681 = vsub.f32 %v585, %v635
        %v682 = vsub.f32 %v586, %v637
        %v683 = vsub.f32 %v587, %v639
        %v684 = vsub.f32 %v588, %v641
        %v685 = vsub.f32 %v589, %v643
        %v686 = vsub.f32 %v590, %v645
        %v687 = vsub.f32 %v591, %v647
        %v688 = vsub.f32 %v592, %v649
        %v689 = vsub.f32 %v593, %v651
        %v690 = vsub.f32 %v594, %v653
        %v691 = vsub.f32 %v595, %v655
        %v692 = vsub.f32 %v596, %v657
        %v693 = vsub.f32 %v597, %v659
        %v694 = vsub.f32 %v598, %v661
        %v695 = vsub.f32 %v599, %v663
        %v696 = vmax.f32 %v680, 0.0
        %v697 = vmax.f32 %v681, 0.0
        %v698 = vmax.f32 %v682, 0.0
        %v699 = vmax.f32 %v683, 0.0
        %v700 = vmax.f32 %v684, 0.0
        %v701 = vmax.f32 %v685, 0.0
        %v702 = vmax.f32 %v686, 0.0
        %v703 = vmax.f32 %v687, 0.0
        %v704 = vmax.f32 %v688, 0.0
        %v705 = vmax.f32 %v689, 0.0
        %v706 = vmax.f32 %v690, 0.0
        %v707 = vmax.f32 %v691, 0.0
        %v708 = vmax.f32 %v692, 0.0
        %v709 = vmax.f32 %v693, 0.0
        %v710 = vmax.f32 %v694, 0.0
        %v711 = vmax.f32 %v695, 0.0
        %v712 = vpack.c.bf16 %v489, %v488
        %v713 = vpack.c.bf16 %v491, %v490
        %v714 = vpack.c.bf16 %v493, %v492
        %v715 = vpack.c.bf16 %v495, %v494
        %v716 = vpack.c.bf16 %v497, %v496
        %v717 = vpack.c.bf16 %v499, %v498
        %v718 = vpack.c.bf16 %v501, %v500
        %v719 = vpack.c.bf16 %v503, %v502
        %v720 = vperm.slane %v345, 0
        %729 = vrot.lane.b32.xlu0 %v712, 48
        %v730 = vpop.permute.xlu0 %729
        %731 = vrot.lane.b32.xlu0 %v713, 48
        %v732 = vpop.permute.xlu0 %731
        %733 = vrot.lane.b32.xlu0 %v714, 48
        %v734 = vpop.permute.xlu0 %733
        %735 = vrot.lane.b32.xlu0 %v715, 48
        %v736 = vpop.permute.xlu0 %735
        %737 = vrot.lane.b32.xlu0 %v716, 48
        %v738 = vpop.permute.xlu0 %737
        %739 = vrot.lane.b32.xlu0 %v717, 48
        %v740 = vpop.permute.xlu0 %739
        %741 = vrot.lane.b32.xlu0 %v718, 48
        %v742 = vpop.permute.xlu0 %741
        %743 = vrot.lane.b32.xlu0 %v719, 48
        %v744 = vpop.permute.xlu0 %743
        %v749 = vunpack.c.l.b16 %v338
        %v750 = vunpack.c.l.b16 %v339
        %v751 = vunpack.c.l.b16 %v340
        %v752 = vunpack.c.l.b16 %v341
        %v753 = vpack.c.b16 %v750, %v749
        %v754 = vpack.c.b16 %v752, %v751
        %v758 = vsel %vm550, %v730, 0
        %v761 = vsel %vm550, %v732, 0
        %v764 = vsel %vm550, %v734, 0
        %v767 = vsel %vm550, %v736, 0
        %v770 = vsel %vm550, %v738, 0
        %v773 = vsel %vm550, %v740, 0
        %v776 = vsel %vm550, %v742, 0
        %v779 = vsel %vm550, %v744, 0
        %781 = vmatpush.bf16.msra.mxu0 0
        %782 = vmatpush.bf16.msra.mxu0 0
        %783 = vmatpush.bf16.msra.mxu0 0
        %784 = vmatpush.bf16.msra.mxu0 0
        %785 = vmatpush.bf16.msra.mxu0 0
        %786 = vmatpush.bf16.msra.mxu0 0
        %787 = vmatpush.bf16.msra.mxu0 %v754
        %788 = vmatpush.bf16.msra.mxu0 %v753
        %789 = vmatmul.bf16.gmra.mxu0 %v758
        %v790 = vpop.f32.mrf.mxu0
        %v791 = vadd.f32 %v720, %v790
        %v792 = vpop.f32.mrf.mxu0
        %v793 = vadd.f32 %v720, %v792
        %794 = vmatmul.bf16.gmra.mxu0 %v761
        %v795 = vpop.f32.mrf.mxu0
        %v796 = vadd.f32 %v720, %v795
        %v797 = vpop.f32.mrf.mxu0
        %v798 = vadd.f32 %v720, %v797
        %799 = vmatmul.bf16.gmra.mxu0 %v764
        %v800 = vpop.f32.mrf.mxu0
        %v801 = vadd.f32 %v720, %v800
        %v802 = vpop.f32.mrf.mxu0
        %v803 = vadd.f32 %v720, %v802
        %804 = vmatmul.bf16.gmra.mxu0 %v767
        %v805 = vpop.f32.mrf.mxu0
        %v806 = vadd.f32 %v720, %v805
        %v807 = vpop.f32.mrf.mxu0
        %v808 = vadd.f32 %v720, %v807
        %809 = vmatmul.bf16.gmra.mxu0 %v770
        %v810 = vpop.f32.mrf.mxu0
        %v811 = vadd.f32 %v720, %v810
        %v812 = vpop.f32.mrf.mxu0
        %v813 = vadd.f32 %v720, %v812
        %814 = vmatmul.bf16.gmra.mxu0 %v773
        %v815 = vpop.f32.mrf.mxu0
        %v816 = vadd.f32 %v720, %v815
        %v817 = vpop.f32.mrf.mxu0
        %v818 = vadd.f32 %v720, %v817
        %819 = vmatmul.bf16.gmra.mxu0 %v776
        %v820 = vpop.f32.mrf.mxu0
        %v821 = vadd.f32 %v720, %v820
        %v822 = vpop.f32.mrf.mxu0
        %v823 = vadd.f32 %v720, %v822
        %824 = vmatmul.bf16.gmra.mxu0 %v779
        %v825 = vpop.f32.mrf.mxu0
        %v826 = vadd.f32 %v720, %v825
        %v827 = vpop.f32.mrf.mxu0
        %v828 = vadd.f32 %v720, %v827
        %829 = vdwg.mxu0
        %v830 = vmax.f32 %v791, 0.0
        %v831 = vmax.f32 %v793, 0.0
        %v832 = vmax.f32 %v796, 0.0
        %v833 = vmax.f32 %v798, 0.0
        %v834 = vmax.f32 %v801, 0.0
        %v835 = vmax.f32 %v803, 0.0
        %v836 = vmax.f32 %v806, 0.0
        %v837 = vmax.f32 %v808, 0.0
        %v838 = vmax.f32 %v811, 0.0
        %v839 = vmax.f32 %v813, 0.0
        %v840 = vmax.f32 %v816, 0.0
        %v841 = vmax.f32 %v818, 0.0
        %v842 = vmax.f32 %v821, 0.0
        %v843 = vmax.f32 %v823, 0.0
        %v844 = vmax.f32 %v826, 0.0
        %v845 = vmax.f32 %v828, 0.0
        %847 = vset.pattern.permute.xlu0 0
        %848 = vperm.xlu0 %847, %v314
        %v849 = vpop.permute.xlu0 %848
        %852 = vset.pattern.permute.xlu0 0
        %853 = vperm.xlu0 %852, %v315
        %v854 = vpop.permute.xlu0 %853
        %857 = vset.pattern.permute.xlu0 0
        %858 = vperm.xlu0 %857, %v316
        %v859 = vpop.permute.xlu0 %858
        %862 = vset.pattern.permute.xlu0 0
        %863 = vperm.xlu0 %862, %v317
        %v864 = vpop.permute.xlu0 %863
        %867 = vset.pattern.permute.xlu0 0
        %868 = vperm.xlu0 %867, %v318
        %v869 = vpop.permute.xlu0 %868
        %872 = vset.pattern.permute.xlu0 0
        %873 = vperm.xlu0 %872, %v319
        %v874 = vpop.permute.xlu0 %873
        %877 = vset.pattern.permute.xlu0 0
        %878 = vperm.xlu0 %877, %v320
        %v879 = vpop.permute.xlu0 %878
        %882 = vset.pattern.permute.xlu0 0
        %883 = vperm.xlu0 %882, %v321
        %v884 = vpop.permute.xlu0 %883
        %887 = vset.pattern.permute.xlu0 0
        %888 = vperm.xlu0 %887, %v322
        %v889 = vpop.permute.xlu0 %888
        %892 = vset.pattern.permute.xlu0 0
        %893 = vperm.xlu0 %892, %v323
        %v894 = vpop.permute.xlu0 %893
        %897 = vset.pattern.permute.xlu0 0
        %898 = vperm.xlu0 %897, %v324
        %v899 = vpop.permute.xlu0 %898
        %902 = vset.pattern.permute.xlu0 0
        %903 = vperm.xlu0 %902, %v325
        %v904 = vpop.permute.xlu0 %903
        %907 = vset.pattern.permute.xlu0 0
        %908 = vperm.xlu0 %907, %v326
        %v909 = vpop.permute.xlu0 %908
        %912 = vset.pattern.permute.xlu0 0
        %913 = vperm.xlu0 %912, %v327
        %v914 = vpop.permute.xlu0 %913
        %917 = vset.pattern.permute.xlu0 0
        %918 = vperm.xlu0 %917, %v328
        %v919 = vpop.permute.xlu0 %918
        %922 = vset.pattern.permute.xlu0 0
        %923 = vperm.xlu0 %922, %v329
        %v924 = vpop.permute.xlu0 %923
        %v926 = vmul.f32 %v849, %v830
        %v927 = vmul.f32 %v854, %v831
        %v928 = vmul.f32 %v859, %v832
        %v929 = vmul.f32 %v864, %v833
        %v930 = vmul.f32 %v869, %v834
        %v931 = vmul.f32 %v874, %v835
        %v932 = vmul.f32 %v879, %v836
        %v933 = vmul.f32 %v884, %v837
        %v934 = vmul.f32 %v889, %v838
        %v935 = vmul.f32 %v894, %v839
        %v936 = vmul.f32 %v899, %v840
        %v937 = vmul.f32 %v904, %v841
        %v938 = vmul.f32 %v909, %v842
        %v939 = vmul.f32 %v914, %v843
        %v940 = vmul.f32 %v919, %v844
        %v941 = vmul.f32 %v924, %v845
        %v942 = vmul.f32 %v696, %v488
        %v943 = vmul.f32 %v697, %v489
        %v944 = vmul.f32 %v698, %v490
        %v945 = vmul.f32 %v699, %v491
        %v946 = vmul.f32 %v700, %v492
        %v947 = vmul.f32 %v701, %v493
        %v948 = vmul.f32 %v702, %v494
        %v949 = vmul.f32 %v703, %v495
        %v950 = vmul.f32 %v704, %v496
        %v951 = vmul.f32 %v705, %v497
        %v952 = vmul.f32 %v706, %v498
        %v953 = vmul.f32 %v707, %v499
        %v954 = vmul.f32 %v708, %v500
        %v955 = vmul.f32 %v709, %v501
        %v956 = vmul.f32 %v710, %v502
        %v957 = vmul.f32 %v711, %v503
        %v958 = vmul.f32 %v926, %v942
        %v959 = vmul.f32 %v927, %v943
        %v960 = vmul.f32 %v928, %v944
        %v961 = vmul.f32 %v929, %v945
        %v962 = vmul.f32 %v930, %v946
        %v963 = vmul.f32 %v931, %v947
        %v964 = vmul.f32 %v932, %v948
        %v965 = vmul.f32 %v933, %v949
        %v966 = vmul.f32 %v934, %v950
        %v967 = vmul.f32 %v935, %v951
        %v968 = vmul.f32 %v936, %v952
        %v969 = vmul.f32 %v937, %v953
        %v970 = vmul.f32 %v938, %v954
        %v971 = vmul.f32 %v939, %v955
        %v972 = vmul.f32 %v940, %v956
        %v973 = vmul.f32 %v941, %v957
        %v974 = vsel %vm550, %v958, 0.0
        %v975 = vrot.slane %v974, 4
        %v976 = vadd.f32 %v974, %v975
        %v977 = vrot.slane %v976, 2
        %v978 = vadd.f32 %v976, %v977
        %v979 = vrot.slane %v978, 1
        %v980 = vadd.f32 %v978, %v979
        %v981 = vsel %vm550, %v959, 0.0
        %v982 = vrot.slane %v981, 4
        %v983 = vadd.f32 %v981, %v982
        %v984 = vrot.slane %v983, 2
        %v985 = vadd.f32 %v983, %v984
        %v986 = vrot.slane %v985, 1
        %v987 = vadd.f32 %v985, %v986
        %v988 = vsel %vm550, %v960, 0.0
        %v989 = vrot.slane %v988, 4
        %v990 = vadd.f32 %v988, %v989
        %v991 = vrot.slane %v990, 2
        %v992 = vadd.f32 %v990, %v991
        %v993 = vrot.slane %v992, 1
        %v994 = vadd.f32 %v992, %v993
        %v995 = vsel %vm550, %v961, 0.0
        %v996 = vrot.slane %v995, 4
        %v997 = vadd.f32 %v995, %v996
        %v998 = vrot.slane %v997, 2
        %v999 = vadd.f32 %v997, %v998
        %v1000 = vrot.slane %v999, 1
        %v1001 = vadd.f32 %v999, %v1000
        %v1002 = vsel %vm550, %v962, 0.0
        %v1003 = vrot.slane %v1002, 4
        %v1004 = vadd.f32 %v1002, %v1003
        %v1005 = vrot.slane %v1004, 2
        %v1006 = vadd.f32 %v1004, %v1005
        %v1007 = vrot.slane %v1006, 1
        %v1008 = vadd.f32 %v1006, %v1007
        %v1009 = vsel %vm550, %v963, 0.0
        %v1010 = vrot.slane %v1009, 4
        %v1011 = vadd.f32 %v1009, %v1010
        %v1012 = vrot.slane %v1011, 2
        %v1013 = vadd.f32 %v1011, %v1012
        %v1014 = vrot.slane %v1013, 1
        %v1015 = vadd.f32 %v1013, %v1014
        %v1016 = vsel %vm550, %v964, 0.0
        %v1017 = vrot.slane %v1016, 4
        %v1018 = vadd.f32 %v1016, %v1017
        %v1019 = vrot.slane %v1018, 2
        %v1020 = vadd.f32 %v1018, %v1019
        %v1021 = vrot.slane %v1020, 1
        %v1022 = vadd.f32 %v1020, %v1021
        %v1023 = vsel %vm550, %v965, 0.0
        %v1024 = vrot.slane %v1023, 4
        %v1025 = vadd.f32 %v1023, %v1024
        %v1026 = vrot.slane %v1025, 2
        %v1027 = vadd.f32 %v1025, %v1026
        %v1028 = vrot.slane %v1027, 1
        %v1029 = vadd.f32 %v1027, %v1028
        %v1030 = vsel %vm550, %v966, 0.0
        %v1031 = vrot.slane %v1030, 4
        %v1032 = vadd.f32 %v1030, %v1031
        %v1033 = vrot.slane %v1032, 2
        %v1034 = vadd.f32 %v1032, %v1033
        %v1035 = vrot.slane %v1034, 1
        %v1036 = vadd.f32 %v1034, %v1035
        %v1037 = vsel %vm550, %v967, 0.0
        %v1038 = vrot.slane %v1037, 4
        %v1039 = vadd.f32 %v1037, %v1038
        %v1040 = vrot.slane %v1039, 2
        %v1041 = vadd.f32 %v1039, %v1040
        %v1042 = vrot.slane %v1041, 1
        %v1043 = vadd.f32 %v1041, %v1042
        %v1044 = vsel %vm550, %v968, 0.0
        %v1045 = vrot.slane %v1044, 4
        %v1046 = vadd.f32 %v1044, %v1045
        %v1047 = vrot.slane %v1046, 2
        %v1048 = vadd.f32 %v1046, %v1047
        %v1049 = vrot.slane %v1048, 1
        %v1050 = vadd.f32 %v1048, %v1049
        %v1051 = vsel %vm550, %v969, 0.0
        %v1052 = vrot.slane %v1051, 4
        %v1053 = vadd.f32 %v1051, %v1052
        %v1054 = vrot.slane %v1053, 2
        %v1055 = vadd.f32 %v1053, %v1054
        %v1056 = vrot.slane %v1055, 1
        %v1057 = vadd.f32 %v1055, %v1056
        %v1058 = vsel %vm550, %v970, 0.0
        %v1059 = vrot.slane %v1058, 4
        %v1060 = vadd.f32 %v1058, %v1059
        %v1061 = vrot.slane %v1060, 2
        %v1062 = vadd.f32 %v1060, %v1061
        %v1063 = vrot.slane %v1062, 1
        %v1064 = vadd.f32 %v1062, %v1063
        %v1065 = vsel %vm550, %v971, 0.0
        %v1066 = vrot.slane %v1065, 4
        %v1067 = vadd.f32 %v1065, %v1066
        %v1068 = vrot.slane %v1067, 2
        %v1069 = vadd.f32 %v1067, %v1068
        %v1070 = vrot.slane %v1069, 1
        %v1071 = vadd.f32 %v1069, %v1070
        %v1072 = vsel %vm550, %v972, 0.0
        %v1073 = vrot.slane %v1072, 4
        %v1074 = vadd.f32 %v1072, %v1073
        %v1075 = vrot.slane %v1074, 2
        %v1076 = vadd.f32 %v1074, %v1075
        %v1077 = vrot.slane %v1076, 1
        %v1078 = vadd.f32 %v1076, %v1077
        %v1079 = vsel %vm550, %v973, 0.0
        %v1080 = vrot.slane %v1079, 4
        %v1081 = vadd.f32 %v1079, %v1080
        %v1082 = vrot.slane %v1081, 2
        %v1083 = vadd.f32 %v1081, %v1082
        %v1084 = vrot.slane %v1083, 1
        %v1085 = vadd.f32 %v1083, %v1084
        %vm1102 = vcmask 1041409
        %v1103 = vsel %vm1102, %v987, %v980
        %vm1104 = vcmask 1042434
        %v1105 = vsel %vm1104, %v994, %v1103
        %vm1106 = vcmask 1043459
        %v1107 = vsel %vm1106, %v1001, %v1105
        %vm1108 = vcmask 1044484
        %v1109 = vsel %vm1108, %v1008, %v1107
        %vm1110 = vcmask 1045509
        %v1111 = vsel %vm1110, %v1015, %v1109
        %vm1112 = vcmask 1046534
        %v1113 = vsel %vm1112, %v1022, %v1111
        %vm1114 = vcmask 1047559
        %v1115 = vsel %vm1114, %v1029, %v1113
        %v1116 = vsel %vm1102, %v1043, %v1036
        %v1117 = vsel %vm1104, %v1050, %v1116
        %v1118 = vsel %vm1106, %v1057, %v1117
        %v1119 = vsel %vm1108, %v1064, %v1118
        %v1120 = vsel %vm1110, %v1071, %v1119
        %v1121 = vsel %vm1112, %v1078, %v1120
        %v1122 = vsel %vm1114, %v1085, %v1121
        %1123 = vrot.lane.b32.xlu0 %v1115, 16
        %v1124 = vpop.permute.xlu0 %1123
        %1125 = vrot.lane.b32.xlu0 %v1122, 16
        %v1126 = vpop.permute.xlu0 %1125
        %vm1129 = vcmask 392320
        %1130 = vst.msk [vmem:[%s277] sm:$0xff] %vm1129, %v1124
        %1131 = vst.msk [vmem:[%s277 + $0x8] sm:$0xff] %vm1129, %v1126
        %vm1132 = vcmask 392448
        %v1133 = vsel %vm1132, %v488, -inf
        %v1134 = vrot.slane %v1133, 4
        %v1135 = vmax.f32 %v1133, %v1134
        %v1136 = vrot.slane %v1135, 2
        %v1137 = vmax.f32 %v1135, %v1136
        %v1138 = vrot.slane %v1137, 1
        %v1139 = vmax.f32 %v1137, %v1138
        %v1140 = vsel %vm1132, %v489, -inf
        %v1141 = vrot.slane %v1140, 4
        %v1142 = vmax.f32 %v1140, %v1141
        %v1143 = vrot.slane %v1142, 2
        %v1144 = vmax.f32 %v1142, %v1143
        %v1145 = vrot.slane %v1144, 1
        %v1146 = vmax.f32 %v1144, %v1145
        %v1147 = vsel %vm1132, %v490, -inf
        %v1148 = vrot.slane %v1147, 4
        %v1149 = vmax.f32 %v1147, %v1148
        %v1150 = vrot.slane %v1149, 2
        %v1151 = vmax.f32 %v1149, %v1150
        %v1152 = vrot.slane %v1151, 1
        %v1153 = vmax.f32 %v1151, %v1152
        %v1154 = vsel %vm1132, %v491, -inf
        %v1155 = vrot.slane %v1154, 4
        %v1156 = vmax.f32 %v1154, %v1155
        %v1157 = vrot.slane %v1156, 2
        %v1158 = vmax.f32 %v1156, %v1157
        %v1159 = vrot.slane %v1158, 1
        %v1160 = vmax.f32 %v1158, %v1159
        %v1161 = vsel %vm1132, %v492, -inf
        %v1162 = vrot.slane %v1161, 4
        %v1163 = vmax.f32 %v1161, %v1162
        %v1164 = vrot.slane %v1163, 2
        %v1165 = vmax.f32 %v1163, %v1164
        %v1166 = vrot.slane %v1165, 1
        %v1167 = vmax.f32 %v1165, %v1166
        %v1168 = vsel %vm1132, %v493, -inf
        %v1169 = vrot.slane %v1168, 4
        %v1170 = vmax.f32 %v1168, %v1169
        %v1171 = vrot.slane %v1170, 2
        %v1172 = vmax.f32 %v1170, %v1171
        %v1173 = vrot.slane %v1172, 1
        %v1174 = vmax.f32 %v1172, %v1173
        %v1175 = vsel %vm1132, %v494, -inf
        %v1176 = vrot.slane %v1175, 4
        %v1177 = vmax.f32 %v1175, %v1176
        %v1178 = vrot.slane %v1177, 2
        %v1179 = vmax.f32 %v1177, %v1178
        %v1180 = vrot.slane %v1179, 1
        %v1181 = vmax.f32 %v1179, %v1180
        %v1182 = vsel %vm1132, %v495, -inf
        %v1183 = vrot.slane %v1182, 4
        %v1184 = vmax.f32 %v1182, %v1183
        %v1185 = vrot.slane %v1184, 2
        %v1186 = vmax.f32 %v1184, %v1185
        %v1187 = vrot.slane %v1186, 1
        %v1188 = vmax.f32 %v1186, %v1187
        %v1189 = vsel %vm1132, %v496, -inf
        %v1190 = vrot.slane %v1189, 4
        %v1191 = vmax.f32 %v1189, %v1190
        %v1192 = vrot.slane %v1191, 2
        %v1193 = vmax.f32 %v1191, %v1192
        %v1194 = vrot.slane %v1193, 1
        %v1195 = vmax.f32 %v1193, %v1194
        %v1196 = vsel %vm1132, %v497, -inf
        %v1197 = vrot.slane %v1196, 4
        %v1198 = vmax.f32 %v1196, %v1197
        %v1199 = vrot.slane %v1198, 2
        %v1200 = vmax.f32 %v1198, %v1199
        %v1201 = vrot.slane %v1200, 1
        %v1202 = vmax.f32 %v1200, %v1201
        %v1203 = vsel %vm1132, %v498, -inf
        %v1204 = vrot.slane %v1203, 4
        %v1205 = vmax.f32 %v1203, %v1204
        %v1206 = vrot.slane %v1205, 2
        %v1207 = vmax.f32 %v1205, %v1206
        %v1208 = vrot.slane %v1207, 1
        %v1209 = vmax.f32 %v1207, %v1208
        %v1210 = vsel %vm1132, %v499, -inf
        %v1211 = vrot.slane %v1210, 4
        %v1212 = vmax.f32 %v1210, %v1211
        %v1213 = vrot.slane %v1212, 2
        %v1214 = vmax.f32 %v1212, %v1213
        %v1215 = vrot.slane %v1214, 1
        %v1216 = vmax.f32 %v1214, %v1215
        %v1217 = vsel %vm1132, %v500, -inf
        %v1218 = vrot.slane %v1217, 4
        %v1219 = vmax.f32 %v1217, %v1218
        %v1220 = vrot.slane %v1219, 2
        %v1221 = vmax.f32 %v1219, %v1220
        %v1222 = vrot.slane %v1221, 1
        %v1223 = vmax.f32 %v1221, %v1222
        %v1224 = vsel %vm1132, %v501, -inf
        %v1225 = vrot.slane %v1224, 4
        %v1226 = vmax.f32 %v1224, %v1225
        %v1227 = vrot.slane %v1226, 2
        %v1228 = vmax.f32 %v1226, %v1227
        %v1229 = vrot.slane %v1228, 1
        %v1230 = vmax.f32 %v1228, %v1229
        %v1231 = vsel %vm1132, %v502, -inf
        %v1232 = vrot.slane %v1231, 4
        %v1233 = vmax.f32 %v1231, %v1232
        %v1234 = vrot.slane %v1233, 2
        %v1235 = vmax.f32 %v1233, %v1234
        %v1236 = vrot.slane %v1235, 1
        %v1237 = vmax.f32 %v1235, %v1236
        %v1238 = vsel %vm1132, %v503, -inf
        %v1239 = vrot.slane %v1238, 4
        %v1240 = vmax.f32 %v1238, %v1239
        %v1241 = vrot.slane %v1240, 2
        %v1242 = vmax.f32 %v1240, %v1241
        %v1243 = vrot.slane %v1242, 1
        %v1244 = vmax.f32 %v1242, %v1243
        %v1261 = vsel %vm1102, %v1146, %v1139
        %v1262 = vsel %vm1104, %v1153, %v1261
        %v1263 = vsel %vm1106, %v1160, %v1262
        %v1264 = vsel %vm1108, %v1167, %v1263
        %v1265 = vsel %vm1110, %v1174, %v1264
        %v1266 = vsel %vm1112, %v1181, %v1265
        %v1267 = vsel %vm1114, %v1188, %v1266
        %v1268 = vsel %vm1102, %v1202, %v1195
        %v1269 = vsel %vm1104, %v1209, %v1268
        %v1270 = vsel %vm1106, %v1216, %v1269
        %v1271 = vsel %vm1108, %v1223, %v1270
        %v1272 = vsel %vm1110, %v1230, %v1271
        %v1273 = vsel %vm1112, %v1237, %v1272
        %v1274 = vsel %vm1114, %v1244, %v1273
        %1275 = vrot.lane.b32.xlu0 %v1267, 96
        %v1276 = vpop.permute.xlu0 %1275
        %1277 = vrot.lane.b32.xlu0 %v1274, 96
        %v1278 = vpop.permute.xlu0 %1277
        %1281 = vst.msk [vmem:[%s277] sm:$0xff] %vm516, %v1276
        %1282 = vst.msk [vmem:[%s277 + $0x8] sm:$0xff] %vm516, %v1278
        %s1283 = sand.u32 %s169, 1
        %s1284 = scalar_lea.sflag [#allocation3], %s1283
        %s1285 = sand.u32 %s169, 1
        %s1286 = smul.addr %s1285, 16
        %s1287 = scalar_lea.vmem [#allocation2], %s1286
        // Predicated region
        $region45: #{tpu_custom_call.1} parent=43 // pred_check
          %p1288 = pneg %p179
        $region46: #{tpu_custom_call.1} parent=43 // pred_check_branch
          %1290 = sbr.rel (%p1288) target = $region48
        $region47: #{tpu_custom_call.1} parent=43 // pred_region
          %s1291 = smul.u32 2, %s20
          %1293 = vsyncadd %s1284, 0
          %s1294 = smul.addr %s1291, 8
          %s1295 = scalar_lea.hbm %s6, %s1294
          %s1296 = sshll.u32 %s1287, 4
          %s1297 = int_to_ptr.vmem [resolvable:$true] %s1296
          %s1298 = sshll.u32 %s1295, 4
          %s1299 = int_to_ptr.hbm [resolvable:$true] %s1298
          %1304 = dma.vmem_to_hbm [thread:$0]  %s1297, 256, %s1299, %s1284, 128, 128, 8
        $region48: #{tpu_custom_call.1} parent=43 // pred_fallthru
          _
      $region44: #{tpu_custom_call.1} parent=5 // pred_fallthru
        _
      %p1305 = scmp.le.s32.totalorder 2, %s15
      // Predicated region
      $region49: #{tpu_custom_call.1} parent=5 // pred_check
        %p1306 = pneg %p1305
      $region50: #{tpu_custom_call.1} parent=5 // pred_check_branch
        %1308 = sbr.rel (%p1306) target = $region52
      $region51: #{tpu_custom_call.1} parent=5 // pred_region
        %s1309 = ssub.s32 %s15, 2
        // Predicated region
        $region53: #{tpu_custom_call.1} parent=51 // pred_check
          %p1310 = pneg %p185
        $region54: #{tpu_custom_call.1} parent=51 // pred_check_branch
          %1312 = sbr.rel (%p1310) target = $region56
        $region55: #{tpu_custom_call.1} parent=51 // pred_region
          %s1313 = sand.u32 %s170, 1
          %s1314 = scalar_lea.sflag [#allocation3], %s1313
          %s1315 = sand.u32 %s170, 1
          %s1316 = smul.addr %s1315, 16
          %s1317 = scalar_lea.vmem [#allocation2], %s1316
          %1319 = dma.done %s1314, 256
        $region56: #{tpu_custom_call.1} parent=51 // pred_fallthru
          _
      $region52: #{tpu_custom_call.1} parent=5 // pred_fallthru
        _
    $region6: #{tpu_custom_call.1} parent=1 // loop_footer
      %s19 = sadd.s32 1, %s15
    $region7: #{tpu_custom_call.1} parent=1 // loop_footer_branch
      %14 = sbr.rel target = $region3
    $region8: #{tpu_custom_call.1} parent=1 // loop_exit
      _
    %1320 = vsyncpa [#allocation3], 1
    %s1321 = scalar_lea.sflag [#allocation3], 1
    %1322 = vsyncpa %s1321, 1

</llo_original>
